<compile_context>
chip_gen: v6e
topology: v6e:2x2x1
jax: 0.10.0
libtpu: 0.0.40
codegen_flags: <defaults>
</compile_context>

<pallas_src>
import math
import functools
from typing import Any, NamedTuple, Optional

import jax
import jax.numpy as jnp
from jax import lax
from jax.experimental import pallas as pl
from jax.experimental.pallas import tpu as pltpu

_EPS = 1e-12  # F.normalize default eps


def _round_up(x: int, m: int) -> int:
    return ((x + m - 1) // m) * m


def _vmem_capacity_bytes() -> int:
    """Physical per-core VMEM; conservative fallback = v7x (64 MiB)."""
    try:
        return int(pltpu.get_tpu_info().vmem_capacity_bytes)
    except Exception:
        return 64 << 20


class TilePlan(NamedTuple):
    tile_b: int
    tile_n: int
    in_pad: int
    out_pad: int
    b_pad: int
    compute_dtype: Any
    vmem_limit_bytes: int


def plan_arc_margin_tiles(batch: int, in_features: int, out_features: int, k: int,
                          out_dtype, *, tile_b: int = 256, tile_n: int = 2048,
                          use_bf16_matmul: bool = True) -> TilePlan:
    """Pick lane/sublane-friendly, VMEM-fitting tile sizes for the current chip."""
    compute_dtype = jnp.bfloat16 if use_bf16_matmul else jnp.float32
    cbytes = jnp.dtype(compute_dtype).itemsize
    obytes = jnp.dtype(out_dtype).itemsize

    # Don't pad tiny batches up to a huge tile (B=8 would otherwise waste 32x work).
    tile_b = max(8, min(tile_b, _round_up(batch, 8)))
    b_pad = _round_up(batch, tile_b)
    in_pad = _round_up(in_features, 128)

    vmem_budget = int(_vmem_capacity_bytes() * 0.8)  # leave compiler-scratch headroom

    tile_n = min(tile_n, _round_up(out_features, 128))
    tile_n = max(128, (tile_n // 128) * 128)

    def _vmem_need(tn: int) -> int:
        # double-buffered weight / feature / output tiles + slack for internal scratch
        return (2 * k * in_pad * tn * cbytes
                + 2 * tile_b * in_pad * cbytes
                + 2 * tile_b * tn * obytes
                + (4 << 20))

    while tile_n > 128 and _vmem_need(tile_n) > vmem_budget:
        tile_n -= 128

    out_pad = _round_up(out_features, tile_n)
    vmem_limit = int(min(max(_vmem_need(tile_n), 32 << 20), vmem_budget))
    return TilePlan(tile_b, tile_n, in_pad, out_pad, b_pad, compute_dtype, vmem_limit)


def prepare_arc_margin_weight(weight: jax.Array, out_features: int, k: int,
                              plan: TilePlan) -> jax.Array:
    """One-time weight prep: L2-normalize rows, lay out as (K, IN_pad, OUT_pad).

    For inference, call this once and pass the result via `prepared_weight=` so
    the full-HBM normalize/transpose/pad passes are not repeated per call.
    """
    out_k, in_features = weight.shape
    assert out_k == out_features * k
    w32 = weight.astype(jnp.float32)
    inv = lax.rsqrt(jnp.maximum(jnp.sum(w32 * w32, axis=-1, keepdims=True),
                                _EPS * _EPS))
    # Cast narrow before the transpose/pad copies so they move half the bytes.
    wn = (w32 * inv).astype(plan.compute_dtype)
    # PyTorch row r = o*k + i  ->  (K, IN, OUT): subcenter leading, contraction second.
    w3 = wn.reshape(out_features, k, in_features).transpose(1, 2, 0)
    w3 = jnp.pad(w3, ((0, 0),
                      (0, plan.in_pad - in_features),
                      (0, plan.out_pad - out_features)))
    return w3


def _arc_margin_kernel(f_ref, w_ref, o_ref, *, k: int):
    """Hot path: k MXU matmuls + elementwise max over subcenters.

    f_ref : (TB, IN_pad)           pre-normalized feature tile (compute dtype)
    w_ref : (K, IN_pad, TILE_N)    pre-normalized weight tile (compute dtype)
    o_ref : (TB, TILE_N)           cosine output tile
    """
    fn = f_ref[...]
    # (TB, IN) @ (IN, TILE_N): canonical MXU form, f32 accumulation.
    best = jnp.dot(fn, w_ref[0], preferred_element_type=jnp.float32)
    for i in range(1, k):  # k is tiny (3) -> static unroll; max rides in the VPU slot
        best = jnp.maximum(
            best, jnp.dot(fn, w_ref[i], preferred_element_type=jnp.float32))
    o_ref[...] = best.astype(o_ref.dtype)


def arc_margin_product_subcenter(features: jax.Array,
                                 weight: Optional[jax.Array],
                                 out_features: int,
                                 k: int = 3,
                                 *,
                                 tile_b: int = 256,
                                 tile_n: int = 2048,
                                 use_bf16_matmul: bool = True,
                                 plan: Optional[TilePlan] = None,
                                 prepared_weight: Optional[jax.Array] = None
                                 ) -> jax.Array:
    """features: (B, in_features), weight: (out_features*k, in_features) -> (B, out_features)."""
    B, in_features = features.shape

    if plan is None:
        plan = plan_arc_margin_tiles(B, in_features, out_features, k, features.dtype,
                                     tile_b=tile_b, tile_n=tile_n,
                                     use_bf16_matmul=use_bf16_matmul)

    if prepared_weight is None:
        assert weight is not None and weight.shape == (out_features * k, in_features)
        prepared_weight = prepare_arc_margin_weight(weight, out_features, k, plan)
    else:
        assert prepared_weight.shape == (k, plan.in_pad, plan.out_pad)

    # Feature L2-normalization hoisted out of the kernel: done once per call,
    # not once per (batch tile x out_features tile).  Cast to compute dtype
    # before padding so the feature DMA stream is also narrow.
    f32 = features.astype(jnp.float32)
    inv = lax.rsqrt(jnp.maximum(jnp.sum(f32 * f32, axis=-1, keepdims=True),
                                _EPS * _EPS))
    fn = (f32 * inv).astype(plan.compute_dtype)
    f_pad = jnp.pad(fn, ((0, plan.b_pad - B), (0, plan.in_pad - in_features)))

    # n outer / b inner: each weight tile is DMA'd from HBM once per n-step and
    # stays resident across the whole inner batch loop.  Marking b "arbitrary"
    # forces the v7x megacore split onto n, so the weight stream is never
    # duplicated across the two TensorCores.
    grid = (plan.out_pad // plan.tile_n, plan.b_pad // plan.tile_b)

    cbytes = jnp.dtype(plan.compute_dtype).itemsize
    obytes = jnp.dtype(features.dtype).itemsize
    cost = pl.CostEstimate(
        flops=2 * plan.b_pad * plan.in_pad * plan.out_pad * k,
        transcendentals=0,
        bytes_accessed=(prepared_weight.size * cbytes          # weight streamed once
                        + f_pad.size * cbytes * grid[0]        # features re-read per n-step
                        + plan.b_pad * plan.out_pad * obytes)) # output writeback

    out = pl.pallas_call(
        functools.partial(_arc_margin_kernel, k=k),
        out_shape=jax.ShapeDtypeStruct((plan.b_pad, plan.out_pad), features.dtype),
        grid=grid,
        in_specs=[
            # one batch tile per inner grid step; full (padded) feature dim
            pl.BlockSpec((plan.tile_b, plan.in_pad), lambda n, b: (b, 0)),
            # one out_features tile of the pre-normalized weights; constant over b
            pl.BlockSpec((k, plan.in_pad, plan.tile_n), lambda n, b: (0, 0, n)),
        ],
        out_specs=pl.BlockSpec((plan.tile_b, plan.tile_n), lambda n, b: (b, n)),
        compiler_params=pltpu.CompilerParams(
            dimension_semantics=("parallel", "arbitrary"),
            vmem_limit_bytes=plan.vmem_limit_bytes),
        cost_estimate=cost,
    )(f_pad, prepared_weight)

    return out[:B, :out_features]


def _reference(features, weight, out_features, k):
    fn = features / jnp.maximum(
        jnp.linalg.norm(features, axis=-1, keepdims=True), _EPS)
    wn = weight / jnp.maximum(
        jnp.linalg.norm(weight, axis=-1, keepdims=True), _EPS)
    cos_all = fn @ wn.T
    cos_all = cos_all.reshape(-1, out_features, k)
    return cos_all.max(axis=2)


if __name__ == "__main__":
    # Small, deterministic synthetic setup consistent with the module's __init__.
    B = 8
    IN_FEATURES = 32
    OUT_FEATURES = 16
    K = 3

    key = jax.random.PRNGKey(0)
    k_feat, k_w = jax.random.split(key)

    features = jax.random.normal(k_feat, (B, IN_FEATURES), dtype=jnp.float32)

    # reset_parameters(): uniform(-stdv, stdv), stdv = 1/sqrt(in_features)
    stdv = 1.0 / math.sqrt(IN_FEATURES)
    weight = jax.random.uniform(
        k_w, (OUT_FEATURES * K, IN_FEATURES),
        minval=-stdv, maxval=stdv, dtype=jnp.float32)

    ref = _reference(features, weight, OUT_FEATURES, K)

    # Default fast path: bf16 MXU operands, f32 accumulation (looser tolerance).
    out_bf16 = jax.block_until_ready(
        arc_margin_product_subcenter(features, weight, OUT_FEATURES, K))
    assert out_bf16.shape == (B, OUT_FEATURES)
    assert jnp.allclose(out_bf16, ref, atol=2e-2, rtol=2e-2), "bf16 path mismatch"

    # Exact-ish f32 path for a tight correctness check of the kernel structure.
    out_f32 = jax.block_until_ready(
        arc_margin_product_subcenter(features, weight, OUT_FEATURES, K,
                                     use_bf16_matmul=False))
    assert out_f32.shape == (B, OUT_FEATURES)
    assert jnp.allclose(out_f32, ref, atol=1e-4, rtol=1e-4), "f32 path mismatch"

    print("KERNEL_OK")
</pallas_src>

<mosaic_0001>
module attributes {stable_mosaic.version = 11 : i64} {
  func.func @_arc_margin_kernel(%arg0: i32, %arg1: i32, %arg2: memref<8x128xbf16, #tpu.memory_space<vmem>>, %arg3: memref<3x128x128xbf16, #tpu.memory_space<vmem>>, %arg4: memref<8x128xf32, #tpu.memory_space<vmem>>) attributes {dimension_semantics = [#tpu.dimension_semantics<parallel>, #tpu.dimension_semantics<arbitrary>], iteration_bounds = array<i64: 1, 1>, scalar_prefetch = 0 : i64, scratch_operands = 0 : i64, tpu.core_type = #tpu.core_type<tc>, window_params = [{transform_indices = @transform_0, window_bounds = array<i64: 8, 128>}, {transform_indices = @transform_1, window_bounds = array<i64: 3, 128, 128>}, {transform_indices = @transform_2, window_bounds = array<i64: 8, 128>}]} {
    %c0 = arith.constant 0 : index
    %c0_0 = arith.constant 0 : index
    %0 = vector.load %arg2[%c0, %c0_0] : memref<8x128xbf16, #tpu.memory_space<vmem>>, vector<8x128xbf16>
    %c0_1 = arith.constant 0 : index
    %c0_2 = arith.constant 0 : index
    %c0_3 = arith.constant 0 : index
    %1 = vector.load %arg3[%c0_1, %c0_2, %c0_3] : memref<3x128x128xbf16, #tpu.memory_space<vmem>>, vector<1x128x128xbf16>
    %2 = vector.shape_cast %1 : vector<1x128x128xbf16> to vector<128x128xbf16>
    %cst = arith.constant dense<0.000000e+00> : vector<8x128xf32>
    %3 = tpu.matmul %0, %2, %cst {dimension_numbers = #tpu.dot_dimension_numbers<[1], [0], [0], [1], [0, 0, 1, 1], [], []>} : vector<8x128xbf16>, vector<128x128xbf16>, vector<8x128xf32> -> vector<8x128xf32>
    %c1 = arith.constant 1 : index
    %c0_4 = arith.constant 0 : index
    %c0_5 = arith.constant 0 : index
    %4 = vector.load %arg3[%c1, %c0_4, %c0_5] : memref<3x128x128xbf16, #tpu.memory_space<vmem>>, vector<1x128x128xbf16>
    %5 = vector.shape_cast %4 : vector<1x128x128xbf16> to vector<128x128xbf16>
    %cst_6 = arith.constant dense<0.000000e+00> : vector<8x128xf32>
    %6 = tpu.matmul %0, %5, %cst_6 {dimension_numbers = #tpu.dot_dimension_numbers<[1], [0], [0], [1], [0, 0, 1, 1], [], []>} : vector<8x128xbf16>, vector<128x128xbf16>, vector<8x128xf32> -> vector<8x128xf32>
    %7 = arith.maximumf %3, %6 : vector<8x128xf32>
    %c2 = arith.constant 2 : index
    %c0_7 = arith.constant 0 : index
    %c0_8 = arith.constant 0 : index
    %8 = vector.load %arg3[%c2, %c0_7, %c0_8] : memref<3x128x128xbf16, #tpu.memory_space<vmem>>, vector<1x128x128xbf16>
    %9 = vector.shape_cast %8 : vector<1x128x128xbf16> to vector<128x128xbf16>
    %cst_9 = arith.constant dense<0.000000e+00> : vector<8x128xf32>
    %10 = tpu.matmul %0, %9, %cst_9 {dimension_numbers = #tpu.dot_dimension_numbers<[1], [0], [0], [1], [0, 0, 1, 1], [], []>} : vector<8x128xbf16>, vector<128x128xbf16>, vector<8x128xf32> -> vector<8x128xf32>
    %11 = arith.maximumf %7, %10 : vector<8x128xf32>
    %c0_10 = arith.constant 0 : index
    %c0_11 = arith.constant 0 : index
    %12 = vector.load %arg4[%c0_10, %c0_11] : memref<8x128xf32, #tpu.memory_space<vmem>>, vector<8x128xf32>
    tpu.vector_store %arg4[%c0_10, %c0_11], %11 {strides = array<i32>} : memref<8x128xf32, #tpu.memory_space<vmem>>, vector<8x128xf32>,
    return
  }
  func.func @transform_0(%arg0: i32, %arg1: i32) -> (i32, i32) {
    %c0_i32 = arith.constant 0 : i32
    %c0_i32_0 = arith.constant 0 : i32
    return %arg1, %c0_i32 : i32, i32
  }
  func.func @transform_1(%arg0: i32, %arg1: i32) -> (i32, i32, i32) {
    %c0_i32 = arith.constant 0 : i32
    %c0_i32_0 = arith.constant 0 : i32
    %c0_i32_1 = arith.constant 0 : i32
    return %c0_i32, %c0_i32_0, %arg0 : i32, i32, i32
  }
  func.func @transform_2(%arg0: i32, %arg1: i32) -> (i32, i32) {
    %c0_i32 = arith.constant 0 : i32
    return %arg1, %arg0 : i32, i32
  }
}

</mosaic_0001>

<llo_original>
// kernel: tpu_custom_call.1
$region0: #{tpu_custom_call.1}
  #allocation0 [shape = 'u32[]', space=smem, size = 0x4, offset = 0x4, fixed_abs, tag = 'smem constant byte address 0x4 - core index']
  #allocation1 [shape = 'u32[144,128]{1,0:T(1,128)}', space=vmem, size = 0x12000, scoped, tag = 'internal scratch']
  %s0 = inlined_call_operand.hbm [shape: bf16[8,128], index: 0, kind: input, shape index: {}]
  %s1 = inlined_call_operand.hbm [shape: bf16[3,128,128], index: 1, kind: input, shape index: {}]
  %s2 = inlined_call_operand.hbm [shape: f32[8,128], index: 2, kind: output, shape index: {}]
  %s3 = sld [smem:[#allocation0]]
  $region26: #{tpu_custom_call.1} parent=0
    _
  %s5 = ssub.s32 1, %s3
  %s6 = scalar_select 0, %s5, %s3
  $region1: #{tpu_custom_call.1} parent=0
    #allocation2 [shape = 'u8[2048]{0}', space=vmem, size = 0x800, scoped, tag = 'input window, operand 0, single buffered']
    #allocation3 [shape = 's32[1]{0}', space=sflag, size = 0x4, scoped, tag = 'scoped memory for tpu_custom_call.1']
    #allocation4 [shape = 's32[1]{0}', space=sflag, size = 0x4, scoped, tag = 'scoped memory for tpu_custom_call.1']
    #allocation5 [shape = 'u8[98304]{0}', space=vmem, size = 0x18000, scoped, tag = 'input window, operand 1, single buffered']
    #allocation6 [shape = 's32[1]{0}', space=sflag, size = 0x4, scoped, tag = 'scoped memory for tpu_custom_call.1']
    #allocation7 [shape = 'u8[4096]{0}', space=vmem, size = 0x1000, scoped, tag = 'output window, operand 0, single buffered']
    %7 = vsyncpa [#allocation3], 0
    %8 = vsyncpa [#allocation6], 0
    %9 = vsyncpa [#allocation4], 0
    // Predicated region
    $region2: #{tpu_custom_call.1} parent=1 // pred_check
      _
    $region3: #{tpu_custom_call.1} parent=1 // pred_check_branch
      %11 = sbr.rel (0) target = $region5
    $region4: #{tpu_custom_call.1} parent=1 // pred_region
      %s13 = ssub.s32 64, 64
      %14 = vsyncadd [#allocation3], %s13
      %s16 = sshll.u32 [#allocation2], 4
      %s17 = int_to_ptr.vmem [resolvable:$true] %s16
      %19 = dma.hbm_to_vmem [thread:$0]  %s0, 64, %s17, [#allocation3]
    $region5: #{tpu_custom_call.1} parent=1 // pred_fallthru
      _
    // Predicated region
    $region6: #{tpu_custom_call.1} parent=1 // pred_check
      _
    $region7: #{tpu_custom_call.1} parent=1 // pred_check_branch
      %21 = sbr.rel (0) target = $region9
    $region8: #{tpu_custom_call.1} parent=1 // pred_region
      %s23 = ssub.s32 3072, 3072
      %24 = vsyncadd [#allocation6], %s23
      %s25 = sshll.u32 [#allocation5], 4
      %s26 = int_to_ptr.vmem [resolvable:$true] %s25
      %31 = dma.hbm_to_vmem [thread:$0]  %s1, 3072, %s26, [#allocation6], 64, 64, 4
    $region9: #{tpu_custom_call.1} parent=1 // pred_fallthru
      _
    // Predicated region
    $region10: #{tpu_custom_call.1} parent=1 // pred_check
      _
    $region11: #{tpu_custom_call.1} parent=1 // pred_check_branch
      %33 = sbr.rel (0) target = $region13
    $region12: #{tpu_custom_call.1} parent=1 // pred_region
      %34 = dma.done [#allocation3], 64
    $region13: #{tpu_custom_call.1} parent=1 // pred_fallthru
      _
    // Predicated region
    $region14: #{tpu_custom_call.1} parent=1 // pred_check
      _
    $region15: #{tpu_custom_call.1} parent=1 // pred_check_branch
      %36 = sbr.rel (0) target = $region17
    $region16: #{tpu_custom_call.1} parent=1 // pred_region
      %37 = dma.done [#allocation6], 3072
    $region17: #{tpu_custom_call.1} parent=1 // pred_fallthru
      _
    %v39 = vld [vmem:[#allocation2] sm:$0xf]
    %v40 = vld [vmem:[#allocation5] sm:$0xf]
    %v41 = vld [vmem:[#allocation5 + $0x4] sm:$0xf]
    %v42 = vld [vmem:[#allocation5 + $0x8] sm:$0xf]
    %v43 = vld [vmem:[#allocation5 + $0xc] sm:$0xf]
    %v44 = vld [vmem:[#allocation5 + $0x10] sm:$0xf]
    %v45 = vld [vmem:[#allocation5 + $0x14] sm:$0xf]
    %v46 = vld [vmem:[#allocation5 + $0x18] sm:$0xf]
    %v47 = vld [vmem:[#allocation5 + $0x1c] sm:$0xf]
    %v48 = vld [vmem:[#allocation5 + $0x20] sm:$0xf]
    %v49 = vld [vmem:[#allocation5 + $0x24] sm:$0xf]
    %v50 = vld [vmem:[#allocation5 + $0x28] sm:$0xf]
    %v51 = vld [vmem:[#allocation5 + $0x2c] sm:$0xf]
    %v52 = vld [vmem:[#allocation5 + $0x30] sm:$0xf]
    %v53 = vld [vmem:[#allocation5 + $0x34] sm:$0xf]
    %v54 = vld [vmem:[#allocation5 + $0x38] sm:$0xf]
    %v55 = vld [vmem:[#allocation5 + $0x3c] sm:$0xf]
    %v72 = vunpack.c.l.b16 %v40
    %v73 = vunpack.c.l.b16 %v41
    %v74 = vunpack.c.l.b16 %v42
    %v75 = vunpack.c.l.b16 %v43
    %v76 = vunpack.c.l.b16 %v44
    %v77 = vunpack.c.l.b16 %v45
    %v78 = vunpack.c.l.b16 %v46
    %v79 = vunpack.c.l.b16 %v47
    %v80 = vunpack.c.l.b16 %v48
    %v81 = vunpack.c.l.b16 %v49
    %v82 = vunpack.c.l.b16 %v50
    %v83 = vunpack.c.l.b16 %v51
    %v84 = vunpack.c.l.b16 %v52
    %v85 = vunpack.c.l.b16 %v53
    %v86 = vunpack.c.l.b16 %v54
    %v87 = vunpack.c.l.b16 %v55
    %v88 = vpack.c.b16 %v73, %v72
    %v89 = vpack.c.b16 %v75, %v74
    %v90 = vpack.c.b16 %v77, %v76
    %v91 = vpack.c.b16 %v79, %v78
    %v92 = vpack.c.b16 %v81, %v80
    %v93 = vpack.c.b16 %v83, %v82
    %v94 = vpack.c.b16 %v85, %v84
    %v95 = vpack.c.b16 %v87, %v86
    %104 = vmatprep.subr.bf16.mxu0 0
    %105 = vmatpush1.bf16.msra.mxu0 %v95
    %106 = vmatprep.subr.bf16.mxu0 0
    %107 = vmatpush1.bf16.msra.mxu0 %v94
    %108 = vmatprep.subr.bf16.mxu0 0
    %109 = vmatpush1.bf16.msra.mxu0 %v93
    %110 = vmatprep.subr.bf16.mxu0 0
    %111 = vmatpush1.bf16.msra.mxu0 %v92
    %112 = vmatprep.subr.bf16.mxu0 0
    %113 = vmatpush1.bf16.msra.mxu0 %v91
    %114 = vmatprep.subr.bf16.mxu0 0
    %115 = vmatpush1.bf16.msra.mxu0 %v90
    %116 = vmatprep.subr.bf16.mxu0 0
    %117 = vmatpush1.bf16.msra.mxu0 %v89
    %118 = vmatprep.subr.bf16.mxu0 0
    %119 = vmatpush1.bf16.msra.mxu0 %v88
    %120 = vmatprep.subr.bf16.mxu0 0
    %121 = vmatpush2.bf16.msra.mxu0 0
    %122 = vmatprep.subr.bf16.mxu0 0
    %123 = vmatpush2.bf16.msra.mxu0 0
    %124 = vmatprep.subr.bf16.mxu0 0
    %125 = vmatpush2.bf16.msra.mxu0 0
    %126 = vmatprep.subr.bf16.mxu0 0
    %127 = vmatpush2.bf16.msra.mxu0 0
    %128 = vmatprep.subr.bf16.mxu0 0
    %129 = vmatpush2.bf16.msra.mxu0 0
    %130 = vmatprep.subr.bf16.mxu0 0
    %131 = vmatpush2.bf16.msra.mxu0 0
    %132 = vmatprep.subr.bf16.mxu0 0
    %133 = vmatpush2.bf16.msra.mxu0 0
    %134 = vmatprep.subr.bf16.mxu0 0
    %135 = vmatpush2.bf16.msra.mxu0 0
    %136 = vmatprep.mubr.bf16.mxu0 0
    %137 = vmatmul.mubr.bf16.gmra.mxu0 %v39
    %v138 = vpop.f32.mrf.mxu0
    %v139 = vadd.f32 0.0, %v138
    %v140 = vpop.f32.mrf.mxu0
    %v141 = vpop.f32.mrf.mxu0
    %v142 = vpop.f32.mrf.mxu0
    %143 = vdwg.mxu0
    %s144 = scalar_lea.vmem [#allocation5], 64
    %v145 = vld [vmem:[%s144] sm:$0xf]
    %v146 = vld [vmem:[%s144 + $0x4] sm:$0xf]
    %v147 = vld [vmem:[%s144 + $0x8] sm:$0xf]
    %v148 = vld [vmem:[%s144 + $0xc] sm:$0xf]
    %v149 = vld [vmem:[%s144 + $0x10] sm:$0xf]
    %v150 = vld [vmem:[%s144 + $0x14] sm:$0xf]
    %v151 = vld [vmem:[%s144 + $0x18] sm:$0xf]
    %v152 = vld [vmem:[%s144 + $0x1c] sm:$0xf]
    %v153 = vld [vmem:[%s144 + $0x20] sm:$0xf]
    %v154 = vld [vmem:[%s144 + $0x24] sm:$0xf]
    %v155 = vld [vmem:[%s144 + $0x28] sm:$0xf]
    %v156 = vld [vmem:[%s144 + $0x2c] sm:$0xf]
    %v157 = vld [vmem:[%s144 + $0x30] sm:$0xf]
    %v158 = vld [vmem:[%s144 + $0x34] sm:$0xf]
    %v159 = vld [vmem:[%s144 + $0x38] sm:$0xf]
    %v160 = vld [vmem:[%s144 + $0x3c] sm:$0xf]
    %v177 = vunpack.c.l.b16 %v145
    %v178 = vunpack.c.l.b16 %v146
    %v179 = vunpack.c.l.b16 %v147
    %v180 = vunpack.c.l.b16 %v148
    %v181 = vunpack.c.l.b16 %v149
    %v182 = vunpack.c.l.b16 %v150
    %v183 = vunpack.c.l.b16 %v151
    %v184 = vunpack.c.l.b16 %v152
    %v185 = vunpack.c.l.b16 %v153
    %v186 = vunpack.c.l.b16 %v154
    %v187 = vunpack.c.l.b16 %v155
    %v188 = vunpack.c.l.b16 %v156
    %v189 = vunpack.c.l.b16 %v157
    %v190 = vunpack.c.l.b16 %v158
    %v191 = vunpack.c.l.b16 %v159
    %v192 = vunpack.c.l.b16 %v160
    %v193 = vpack.c.b16 %v178, %v177
    %v194 = vpack.c.b16 %v180, %v179
    %v195 = vpack.c.b16 %v182, %v181
    %v196 = vpack.c.b16 %v184, %v183
    %v197 = vpack.c.b16 %v186, %v185
    %v198 = vpack.c.b16 %v188, %v187
    %v199 = vpack.c.b16 %v190, %v189
    %v200 = vpack.c.b16 %v192, %v191
    %209 = vmatprep.subr.bf16.mxu0 0
    %210 = vmatpush1.bf16.msra.mxu0 %v200
    %211 = vmatprep.subr.bf16.mxu0 0
    %212 = vmatpush1.bf16.msra.mxu0 %v199
    %213 = vmatprep.subr.bf16.mxu0 0
    %214 = vmatpush1.bf16.msra.mxu0 %v198
    %215 = vmatprep.subr.bf16.mxu0 0
    %216 = vmatpush1.bf16.msra.mxu0 %v197
    %217 = vmatprep.subr.bf16.mxu0 0
    %218 = vmatpush1.bf16.msra.mxu0 %v196
    %219 = vmatprep.subr.bf16.mxu0 0
    %220 = vmatpush1.bf16.msra.mxu0 %v195
    %221 = vmatprep.subr.bf16.mxu0 0
    %222 = vmatpush1.bf16.msra.mxu0 %v194
    %223 = vmatprep.subr.bf16.mxu0 0
    %224 = vmatpush1.bf16.msra.mxu0 %v193
    %225 = vmatprep.subr.bf16.mxu0 0
    %226 = vmatpush2.bf16.msra.mxu0 0
    %227 = vmatprep.subr.bf16.mxu0 0
    %228 = vmatpush2.bf16.msra.mxu0 0
    %229 = vmatprep.subr.bf16.mxu0 0
    %230 = vmatpush2.bf16.msra.mxu0 0
    %231 = vmatprep.subr.bf16.mxu0 0
    %232 = vmatpush2.bf16.msra.mxu0 0
    %233 = vmatprep.subr.bf16.mxu0 0
    %234 = vmatpush2.bf16.msra.mxu0 0
    %235 = vmatprep.subr.bf16.mxu0 0
    %236 = vmatpush2.bf16.msra.mxu0 0
    %237 = vmatprep.subr.bf16.mxu0 0
    %238 = vmatpush2.bf16.msra.mxu0 0
    %239 = vmatprep.subr.bf16.mxu0 0
    %240 = vmatpush2.bf16.msra.mxu0 0
    %241 = vmatprep.mubr.bf16.mxu0 0
    %242 = vmatmul.mubr.bf16.gmra.mxu0 %v39
    %v243 = vpop.f32.mrf.mxu0
    %v244 = vadd.f32 0.0, %v243
    %v245 = vpop.f32.mrf.mxu0
    %v246 = vpop.f32.mrf.mxu0
    %v247 = vpop.f32.mrf.mxu0
    %248 = vdwg.mxu0
    %v249 = vmax.f32 %v139, %v244
    %s250 = scalar_lea.vmem [#allocation5], 128
    %v251 = vld [vmem:[%s250] sm:$0xf]
    %v252 = vld [vmem:[%s250 + $0x4] sm:$0xf]
    %v253 = vld [vmem:[%s250 + $0x8] sm:$0xf]
    %v254 = vld [vmem:[%s250 + $0xc] sm:$0xf]
    %v255 = vld [vmem:[%s250 + $0x10] sm:$0xf]
    %v256 = vld [vmem:[%s250 + $0x14] sm:$0xf]
    %v257 = vld [vmem:[%s250 + $0x18] sm:$0xf]
    %v258 = vld [vmem:[%s250 + $0x1c] sm:$0xf]
    %v259 = vld [vmem:[%s250 + $0x20] sm:$0xf]
    %v260 = vld [vmem:[%s250 + $0x24] sm:$0xf]
    %v261 = vld [vmem:[%s250 + $0x28] sm:$0xf]
    %v262 = vld [vmem:[%s250 + $0x2c] sm:$0xf]
    %v263 = vld [vmem:[%s250 + $0x30] sm:$0xf]
    %v264 = vld [vmem:[%s250 + $0x34] sm:$0xf]
    %v265 = vld [vmem:[%s250 + $0x38] sm:$0xf]
    %v266 = vld [vmem:[%s250 + $0x3c] sm:$0xf]
    %v283 = vunpack.c.l.b16 %v251
    %v284 = vunpack.c.l.b16 %v252
    %v285 = vunpack.c.l.b16 %v253
    %v286 = vunpack.c.l.b16 %v254
    %v287 = vunpack.c.l.b16 %v255
    %v288 = vunpack.c.l.b16 %v256
    %v289 = vunpack.c.l.b16 %v257
    %v290 = vunpack.c.l.b16 %v258
    %v291 = vunpack.c.l.b16 %v259
    %v292 = vunpack.c.l.b16 %v260
    %v293 = vunpack.c.l.b16 %v261
    %v294 = vunpack.c.l.b16 %v262
    %v295 = vunpack.c.l.b16 %v263
    %v296 = vunpack.c.l.b16 %v264
    %v297 = vunpack.c.l.b16 %v265
    %v298 = vunpack.c.l.b16 %v266
    %v299 = vpack.c.b16 %v284, %v283
    %v300 = vpack.c.b16 %v286, %v285
    %v301 = vpack.c.b16 %v288, %v287
    %v302 = vpack.c.b16 %v290, %v289
    %v303 = vpack.c.b16 %v292, %v291
    %v304 = vpack.c.b16 %v294, %v293
    %v305 = vpack.c.b16 %v296, %v295
    %v306 = vpack.c.b16 %v298, %v297
    %315 = vmatprep.subr.bf16.mxu0 0
    %316 = vmatpush1.bf16.msra.mxu0 %v306
    %317 = vmatprep.subr.bf16.mxu0 0
    %318 = vmatpush1.bf16.msra.mxu0 %v305
    %319 = vmatprep.subr.bf16.mxu0 0
    %320 = vmatpush1.bf16.msra.mxu0 %v304
    %321 = vmatprep.subr.bf16.mxu0 0
    %322 = vmatpush1.bf16.msra.mxu0 %v303
    %323 = vmatprep.subr.bf16.mxu0 0
    %324 = vmatpush1.bf16.msra.mxu0 %v302
    %325 = vmatprep.subr.bf16.mxu0 0
    %326 = vmatpush1.bf16.msra.mxu0 %v301
    %327 = vmatprep.subr.bf16.mxu0 0
    %328 = vmatpush1.bf16.msra.mxu0 %v300
    %329 = vmatprep.subr.bf16.mxu0 0
    %330 = vmatpush1.bf16.msra.mxu0 %v299
    %331 = vmatprep.subr.bf16.mxu0 0
    %332 = vmatpush2.bf16.msra.mxu0 0
    %333 = vmatprep.subr.bf16.mxu0 0
    %334 = vmatpush2.bf16.msra.mxu0 0
    %335 = vmatprep.subr.bf16.mxu0 0
    %336 = vmatpush2.bf16.msra.mxu0 0
    %337 = vmatprep.subr.bf16.mxu0 0
    %338 = vmatpush2.bf16.msra.mxu0 0
    %339 = vmatprep.subr.bf16.mxu0 0
    %340 = vmatpush2.bf16.msra.mxu0 0
    %341 = vmatprep.subr.bf16.mxu0 0
    %342 = vmatpush2.bf16.msra.mxu0 0
    %343 = vmatprep.subr.bf16.mxu0 0
    %344 = vmatpush2.bf16.msra.mxu0 0
    %345 = vmatprep.subr.bf16.mxu0 0
    %346 = vmatpush2.bf16.msra.mxu0 0
    %347 = vmatprep.mubr.bf16.mxu0 0
    %348 = vmatmul.mubr.bf16.gmra.mxu0 %v39
    %v349 = vpop.f32.mrf.mxu0
    %v350 = vadd.f32 0.0, %v349
    %v351 = vpop.f32.mrf.mxu0
    %v352 = vpop.f32.mrf.mxu0
    %v353 = vpop.f32.mrf.mxu0
    %354 = vdwg.mxu0
    %v355 = vmax.f32 %v249, %v350
    %356 = vst [vmem:[#allocation7] sm:$0xff] %v355
    // Predicated region
    $region18: #{tpu_custom_call.1} parent=1 // pred_check
      _
    $region19: #{tpu_custom_call.1} parent=1 // pred_check_branch
      %358 = sbr.rel (0) target = $region21
    $region20: #{tpu_custom_call.1} parent=1 // pred_region
      %s360 = ssub.s32 128, 128
      %361 = vsyncadd [#allocation4], %s360
      %s363 = sshll.u32 [#allocation7], 4
      %s364 = int_to_ptr.vmem [resolvable:$true] %s363
      %366 = dma.vmem_to_hbm [thread:$0]  %s364, 128, %s2, [#allocation4]
    $region21: #{tpu_custom_call.1} parent=1 // pred_fallthru
      _
    // Predicated region
    $region22: #{tpu_custom_call.1} parent=1 // pred_check
      _
    $region23: #{tpu_custom_call.1} parent=1 // pred_check_branch
      %368 = sbr.rel (0) target = $region25
    $region24: #{tpu_custom_call.1} parent=1 // pred_region
      %369 = dma.done [#allocation4], 128
    $region25: #{tpu_custom_call.1} parent=1 // pred_fallthru
      _
    %370 = vsyncpa [#allocation3], 1
    %371 = vsyncpa [#allocation6], 1
    %372 = vsyncpa [#allocation4], 1

</llo_original>
